<compile_context>
chip_gen: v5e
topology: v5e:2x2
jax: 0.10.0
libtpu: 0.0.40
codegen_flags: <defaults>
</compile_context>

<pallas_src>
import functools

import jax
import jax.numpy as jnp
from jax.experimental import pallas as pl
from jax.experimental.pallas import tpu as pltpu

_MAX_LANES = 1024                    # lane-dense last axis (multiple of 128)
_TARGET_TILE_BYTES = 8 << 20         # ~8 MiB per block
_VMEM_LIMIT_BYTES = 48 * 1024 * 1024  # 4 x 8 MiB resident + headroom; safe on v5e/v6e/v7x


def _general_relu_kernel(x_ref, o_ref, *, leak, sub, maxv):
    x = x_ref[...]
    # leaky_relu(x, leak) if leak is not None else relu(x)
    if leak is not None:
        y = jnp.where(x >= 0, x, x * jnp.asarray(leak, x.dtype))
    else:
        y = jnp.maximum(x, jnp.zeros((), x.dtype))
    if sub is not None:
        y = y - jnp.asarray(sub, x.dtype)
    if maxv is not None:
        y = jnp.minimum(y, jnp.asarray(maxv, x.dtype))
    o_ref[...] = y


def _pick_lanes(total):
    """Largest multiple of 128 (<= _MAX_LANES) that divides `total`, else None."""
    for lanes in range(_MAX_LANES, 0, -128):
        if total % lanes == 0:
            return lanes
    return None


def general_relu(x, leak=None, sub=None, maxv=None):
    """Elementwise GeneralRelu. Any rank/layout; flattened to a lane-dense slab."""
    orig_shape = x.shape
    orig_dtype = x.dtype
    itemsize = jnp.dtype(orig_dtype).itemsize

    total = 1
    for d in orig_shape:
        total *= d
    if total == 0:
        return x

    # Adaptive lane width: prefer an L that divides `total` exactly so no
    # host-side pad/slice (extra HBM passes) is needed.  Otherwise fall back
    # to L=1024 and pad only the final partial row (< 1024 elements).
    lanes = _pick_lanes(total)
    needs_pad = lanes is None
    L = _MAX_LANES if needs_pad else lanes

    rows = pl.cdiv(total, L)
    padded_total = rows * L

    # dtype-aware sublane packing: f32 -> 8, bf16 -> 16, int8/fp8 -> 32
    sub_pack = max(1, 32 // itemsize)

    # ~8 MiB row tile, rounded to the packed sublane count.
    target_rows = max(
        sub_pack, (_TARGET_TILE_BYTES // (L * itemsize)) // sub_pack * sub_pack
    )

    if rows <= sub_pack:
        # Tiny input: one full-array block (block_shape == array shape is legal
        # even when not (8, 128)-divisible).
        tile_rows = rows
    else:
        # Aim for ~4+ grid steps (v7x megacore + in/out DMA overlap), capped
        # at the ~8 MiB target block and floored at one sublane pack.
        quarter = pl.cdiv(pl.cdiv(rows, 4), sub_pack) * sub_pack
        tile_rows = max(sub_pack, min(target_rows, quarter))

    # Partial last block (when tile_rows does not divide rows) is handled by
    # Pallas: OOB reads are padding, OOB writes are masked — safe because the
    # kernel is purely elementwise.
    grid = (pl.cdiv(rows, tile_rows),)

    xf = x.reshape(total)
    if needs_pad and padded_total != total:
        xf = jnp.pad(xf, (0, padded_total - total))  # pad < L elems; harmless
    x2 = xf.reshape(rows, L)

    kernel = functools.partial(_general_relu_kernel, leak=leak, sub=sub, maxv=maxv)

    flops_per_elem = (3 if leak is not None else 1)
    flops_per_elem += (1 if sub is not None else 0) + (1 if maxv is not None else 0)

    out2 = pl.pallas_call(
        kernel,
        out_shape=jax.ShapeDtypeStruct((rows, L), orig_dtype),
        grid_spec=pltpu.PrefetchScalarGridSpec(
            num_scalar_prefetch=0,
            grid=grid,
            in_specs=[pl.BlockSpec((tile_rows, L), lambda i: (i, 0))],
            out_specs=pl.BlockSpec((tile_rows, L), lambda i: (i, 0)),
        ),
        compiler_params=pltpu.CompilerParams(
            dimension_semantics=("parallel",),
            vmem_limit_bytes=_VMEM_LIMIT_BYTES,
        ),
        cost_estimate=pl.CostEstimate(
            flops=flops_per_elem * padded_total,
            transcendentals=0,
            bytes_accessed=2 * padded_total * itemsize,
        ),
    )(x2)

    out = out2.reshape(padded_total)
    if padded_total != total:
        out = out[:total]
    return out.reshape(orig_shape)


def _general_relu_ref(x, leak=None, sub=None, maxv=None):
    y = jnp.where(x >= 0, x, x * leak) if leak is not None else jnp.maximum(x, 0)
    if sub is not None:
        y = y - sub
    if maxv is not None:
        y = jnp.minimum(y, maxv)
    return y


if __name__ == "__main__":
    key = jax.random.PRNGKey(0)
    leak, sub, maxv = 0.1, 0.4, 6.0

    # GeneralRelu(leak=0.1, sub=0.4, maxv=6.0) on an NCHW activation.
    x = jax.random.normal(key, (2, 4, 16, 16), dtype=jnp.float32)
    out = jax.block_until_ready(general_relu(x, leak=leak, sub=sub, maxv=maxv))
    ref = _general_relu_ref(x, leak=leak, sub=sub, maxv=maxv)
    assert out.shape == x.shape and out.dtype == x.dtype
    assert jnp.allclose(out, ref, atol=1e-6, rtol=1e-6)

    # Plain-ReLU path (leak=sub=maxv=None).
    out2 = jax.block_until_ready(general_relu(x))
    assert jnp.allclose(out2, _general_relu_ref(x), atol=1e-6, rtol=1e-6)

    # Element count not a multiple of 128 -> exercises the padded-tail fallback.
    x3 = jax.random.normal(jax.random.PRNGKey(1), (2, 4, 7, 7), dtype=jnp.float32)
    out3 = jax.block_until_ready(general_relu(x3, leak=leak, sub=sub, maxv=maxv))
    assert jnp.allclose(out3, _general_relu_ref(x3, leak=leak, sub=sub, maxv=maxv),
                        atol=1e-6, rtol=1e-6)

    # Multi-block grid with a partial last block (rows=10, tile_rows=8 -> grid=2).
    x4 = jax.random.normal(jax.random.PRNGKey(2), (4, 8, 16, 20), dtype=jnp.float32)
    out4 = jax.block_until_ready(general_relu(x4, leak=leak, sub=sub, maxv=maxv))
    assert jnp.allclose(out4, _general_relu_ref(x4, leak=leak, sub=sub, maxv=maxv),
                        atol=1e-6, rtol=1e-6)

    # bf16 path (dtype-aware sublane packing), multi-step grid.
    x5 = jax.random.normal(jax.random.PRNGKey(3), (2, 16, 32, 32), dtype=jnp.bfloat16)
    out5 = jax.block_until_ready(general_relu(x5, leak=leak, sub=sub, maxv=maxv))
    ref5 = _general_relu_ref(x5.astype(jnp.float32), leak=leak, sub=sub, maxv=maxv)
    assert out5.dtype == jnp.bfloat16
    assert jnp.allclose(out5.astype(jnp.float32), ref5, atol=2e-2, rtol=2e-2)

    print("KERNEL_OK")
</pallas_src>

<mosaic_0001>
module attributes {stable_mosaic.version = 11 : i64} {
  func.func @_general_relu_kernel(%arg0: i32, %arg1: memref<2x1024xf32, #tpu.memory_space<vmem>>, %arg2: memref<2x1024xf32, #tpu.memory_space<vmem>>) attributes {dimension_semantics = [#tpu.dimension_semantics<parallel>], iteration_bounds = array<i64: 1>, scalar_prefetch = 0 : i64, scratch_operands = 0 : i64, tpu.core_type = #tpu.core_type<tc>, window_params = [{transform_indices = @transform_0, window_bounds = array<i64: 2, 1024>}, {transform_indices = @transform_1, window_bounds = array<i64: 2, 1024>}]} {
    %c0 = arith.constant 0 : index
    %c0_0 = arith.constant 0 : index
    %0 = vector.load %arg1[%c0, %c0_0] : memref<2x1024xf32, #tpu.memory_space<vmem>>, vector<2x1024xf32>
    %cst = arith.constant 0.000000e+00 : f32
    %1 = vector.broadcast %cst : f32 to vector<2x1024xf32>
    %2 = arith.cmpf oge, %0, %1 : vector<2x1024xf32>
    %cst_1 = arith.constant 1.000000e-01 : f32
    %3 = vector.broadcast %cst_1 : f32 to vector<2x1024xf32>
    %4 = arith.mulf %0, %3 : vector<2x1024xf32>
    %5 = arith.select %2, %0, %4 : vector<2x1024xi1>, vector<2x1024xf32>
    %cst_2 = arith.constant 4.000000e-01 : f32
    %6 = vector.broadcast %cst_2 : f32 to vector<2x1024xf32>
    %7 = arith.subf %5, %6 : vector<2x1024xf32>
    %cst_3 = arith.constant 6.000000e+00 : f32
    %8 = vector.broadcast %cst_3 : f32 to vector<2x1024xf32>
    %9 = arith.minimumf %7, %8 : vector<2x1024xf32>
    %c0_4 = arith.constant 0 : index
    %c0_5 = arith.constant 0 : index
    %10 = vector.load %arg2[%c0_4, %c0_5] : memref<2x1024xf32, #tpu.memory_space<vmem>>, vector<2x1024xf32>
    tpu.vector_store %arg2[%c0_4, %c0_5], %9 {strides = array<i32>} : memref<2x1024xf32, #tpu.memory_space<vmem>>, vector<2x1024xf32>,
    return
  }
  func.func @transform_0(%arg0: i32) -> (i32, i32) {
    %c0_i32 = arith.constant 0 : i32
    %c0_i32_0 = arith.constant 0 : i32
    return %arg0, %c0_i32 : i32, i32
  }
  func.func @transform_1(%arg0: i32) -> (i32, i32) {
    %c0_i32 = arith.constant 0 : i32
    %c0_i32_0 = arith.constant 0 : i32
    return %arg0, %c0_i32 : i32, i32
  }
}

</mosaic_0001>

<llo_original>
// kernel: tpu_custom_call.1
$region0: #{tpu_custom_call.1}
  #allocation0 [shape = 'u32[]', space=smem, size = 0x4, offset = 0x4, fixed_abs, tag = 'smem constant byte address 0x4 - core index']
  #allocation1 [shape = 'u32[72,128]{1,0:T(1,128)}', space=vmem, size = 0x9000, scoped, tag = 'internal scratch']
  %s0 = inlined_call_operand.hbm [shape: f32[2,1024], index: 0, kind: input, shape index: {}]
  %s1 = inlined_call_operand.hbm [shape: f32[2,1024], index: 1, kind: output, shape index: {}]
  %s2 = sld [smem:[#allocation0]]
  $region18: #{tpu_custom_call.1} parent=0
    _
  %s4 = ssub.s32 1, %s2
  %s5 = scalar_select 0, %s4, %s2
  $region1: #{tpu_custom_call.1} parent=0
    #allocation2 [shape = 'u8[8192]{0}', space=vmem, size = 0x2000, scoped, tag = 'input window, operand 0, single buffered']
    #allocation3 [shape = 's32[1]{0}', space=sflag, size = 0x4, scoped, tag = 'scoped memory for tpu_custom_call.1']
    #allocation4 [shape = 's32[1]{0}', space=sflag, size = 0x4, scoped, tag = 'scoped memory for tpu_custom_call.1']
    #allocation5 [shape = 'u8[8192]{0}', space=vmem, size = 0x2000, scoped, tag = 'output window, operand 0, single buffered']
    %6 = vsyncpa [#allocation3], 0
    %7 = vsyncpa [#allocation4], 0
    // Predicated region
    $region2: #{tpu_custom_call.1} parent=1 // pred_check
      _
    $region3: #{tpu_custom_call.1} parent=1 // pred_check_branch
      %9 = sbr.rel (0) target = $region5
    $region4: #{tpu_custom_call.1} parent=1 // pred_region
      %11 = vsyncadd [#allocation3], 0
      %s13 = sshll.u32 %s0, 4
      %s14 = int_to_ptr.hbm [resolvable:$true] %s13
      %s15 = sshll.u32 [#allocation2], 4
      %s16 = int_to_ptr.vmem [resolvable:$true] %s15
      %18 = dma.hbm_to_vmem [thread:$0]  %s14, 256, %s16, [#allocation3]
    $region5: #{tpu_custom_call.1} parent=1 // pred_fallthru
      _
    // Predicated region
    $region6: #{tpu_custom_call.1} parent=1 // pred_check
      _
    $region7: #{tpu_custom_call.1} parent=1 // pred_check_branch
      %20 = sbr.rel (0) target = $region9
    $region8: #{tpu_custom_call.1} parent=1 // pred_region
      %22 = dma.done [#allocation3], 256
    $region9: #{tpu_custom_call.1} parent=1 // pred_fallthru
      _
    %v23 = vld [vmem:[#allocation2] sm:$0xff]
    %v24 = vld [vmem:[#allocation2 + $0x8] sm:$0xff]
    %vm25 = vcmp.ge.f32.partialorder %v23, 0.0
    %vm26 = vcmp.ge.f32.partialorder %v24, 0.0
    %v27 = vmul.f32 %v23, 0.1
    %v28 = vmul.f32 %v24, 0.1
    %v29 = vsel %vm25, %v23, %v27
    %v30 = vsel %vm26, %v24, %v28
    %v31 = vsub.f32 %v29, 0.4
    %v32 = vsub.f32 %v30, 0.4
    %v33 = vmin.f32 %v31, 6.0
    %v34 = vmin.f32 %v32, 6.0
    %35 = vst [vmem:[#allocation5] sm:$0xff] %v33
    %36 = vst [vmem:[#allocation5 + $0x8] sm:$0xff] %v34
    // Predicated region
    $region10: #{tpu_custom_call.1} parent=1 // pred_check
      _
    $region11: #{tpu_custom_call.1} parent=1 // pred_check_branch
      %38 = sbr.rel (0) target = $region13
    $region12: #{tpu_custom_call.1} parent=1 // pred_region
      %40 = vsyncadd [#allocation4], 0
      %s42 = sshll.u32 [#allocation5], 4
      %s43 = int_to_ptr.vmem [resolvable:$true] %s42
      %s44 = sshll.u32 %s1, 4
      %s45 = int_to_ptr.hbm [resolvable:$true] %s44
      %47 = dma.vmem_to_hbm [thread:$0]  %s43, 256, %s45, [#allocation4]
    $region13: #{tpu_custom_call.1} parent=1 // pred_fallthru
      _
    // Predicated region
    $region14: #{tpu_custom_call.1} parent=1 // pred_check
      _
    $region15: #{tpu_custom_call.1} parent=1 // pred_check_branch
      %49 = sbr.rel (0) target = $region17
    $region16: #{tpu_custom_call.1} parent=1 // pred_region
      %51 = dma.done [#allocation4], 256
    $region17: #{tpu_custom_call.1} parent=1 // pred_fallthru
      _
    %52 = vsyncpa [#allocation3], 1
    %53 = vsyncpa [#allocation4], 1

</llo_original>
